<compile_context>
chip_gen: v7x
topology: tpu7x:2x2x1
jax: 0.10.0
libtpu: 0.0.40
codegen_flags: <defaults>
</compile_context>

<pallas_src>
import jax
import jax.numpy as jnp
from jax import lax
from jax.experimental import pallas as pl
from jax.experimental.pallas import tpu as pltpu

IN_FEATURES = 10
OUT_FEATURES = 5
OUT_PAD = 128          # lane-dense output width (multiple of 128)
MAX_TILE_B = 512       # >=512 rows per step keeps DMA tiles near HBM roofline


def _round_up(n, m):
    return ((n + m - 1) // m) * m


def linear_kernel(x_ref, w_ref, o_ref):
    # x_ref: (tile_b, IN)  f32
    # w_ref: (OUT_PAD, IN) f32  (PyTorch (out, in) layout, rows >=5 are zero)
    # o_ref: (tile_b, OUT_PAD)
    # Contract on IN for both operands (== x @ w.T) so no transpose is needed;
    # fp32 accumulation on the MXU, unmasked 128-lane stores.
    o_ref[...] = lax.dot_general(
        x_ref[...],
        w_ref[...],
        dimension_numbers=(((1,), (1,)), ((), ())),
        preferred_element_type=jnp.float32,
    ).astype(o_ref.dtype)


def linear_no_bias(x, weight):
    """x: (B, 10) f32; weight: (5, 10) f32 (PyTorch nn.Linear layout). Returns (B, 5)."""
    B = x.shape[0]

    # Zero-pad the output dimension of the weight to 128 lanes (one-time cost;
    # in a real model this would be done at parameter-init time).
    w_pad = jnp.zeros((OUT_PAD, IN_FEATURES), weight.dtype).at[:OUT_FEATURES, :].set(weight)

    # Row tile: large batches use 512-row tiles; small batches use one tile
    # rounded up to the sublane multiple of 8.
    tile_b = min(MAX_TILE_B, _round_up(B, 8))
    b_pad = _round_up(B, tile_b)
    x_p = jnp.pad(x, ((0, b_pad - B), (0, 0))) if b_pad != B else x

    out = pl.pallas_call(
        linear_kernel,
        out_shape=jax.ShapeDtypeStruct((b_pad, OUT_PAD), x.dtype),
        grid_spec=pl.GridSpec(
            grid=(b_pad // tile_b,),
            in_specs=[
                # x: tiled over batch only; last dim == full array dim (10).
                pl.BlockSpec((tile_b, IN_FEATURES), lambda i: (i, 0)),
                # weight: full array, resident across all grid steps.
                pl.BlockSpec((OUT_PAD, IN_FEATURES), lambda i: (0, 0)),
            ],
            out_specs=pl.BlockSpec((tile_b, OUT_PAD), lambda i: (i, 0)),
        ),
        compiler_params=pltpu.CompilerParams(
            # Batch axis is independent work -> shard across TCs (v7x megacore).
            dimension_semantics=("parallel",),
        ),
    )(x_p, w_pad)

    return out[:B, :OUT_FEATURES]


if __name__ == "__main__":
    key = jax.random.PRNGKey(0)
    k_x, k_w, k_x2 = jax.random.split(key, 3)

    # nn.init.normal_(mean=0, std=1) on the Linear weight -> standard normal,
    # PyTorch layout (out_features, in_features).
    batch = 8
    x = jax.random.normal(k_x, (batch, IN_FEATURES), dtype=jnp.float32)
    weight = jax.random.normal(k_w, (OUT_FEATURES, IN_FEATURES), dtype=jnp.float32)

    out = linear_no_bias(x, weight)
    jax.block_until_ready(out)

    ref = x @ weight.T
    assert out.shape == (batch, OUT_FEATURES)
    assert jnp.allclose(out, ref, atol=1e-5, rtol=1e-5)

    # Also exercise the row-padding path (B not a multiple of 8).
    x2 = jax.random.normal(k_x2, (17, IN_FEATURES), dtype=jnp.float32)
    out2 = linear_no_bias(x2, weight)
    jax.block_until_ready(out2)
    assert out2.shape == (17, OUT_FEATURES)
    assert jnp.allclose(out2, x2 @ weight.T, atol=1e-5, rtol=1e-5)

    print("KERNEL_OK")
</pallas_src>

<mosaic_0001>
module attributes {stable_mosaic.version = 11 : i64} {
  func.func @linear_kernel(%arg0: i32, %arg1: memref<8x10xf32, #tpu.memory_space<vmem>>, %arg2: memref<128x10xf32, #tpu.memory_space<vmem>>, %arg3: memref<8x128xf32, #tpu.memory_space<vmem>>) attributes {dimension_semantics = [#tpu.dimension_semantics<parallel>], iteration_bounds = array<i64: 1>, scalar_prefetch = 0 : i64, scratch_operands = 0 : i64, tpu.core_type = #tpu.core_type<tc>, window_params = [{transform_indices = @transform_0, window_bounds = array<i64: 8, 10>}, {pipeline_mode = #tpu.pipeline_mode<synchronous>, transform_indices = @transform_1, window_bounds = array<i64: 128, 10>}, {transform_indices = @transform_2, window_bounds = array<i64: 8, 128>}]} {
    %c0 = arith.constant 0 : index
    %c0_0 = arith.constant 0 : index
    %0 = vector.load %arg1[%c0, %c0_0] : memref<8x10xf32, #tpu.memory_space<vmem>>, vector<8x10xf32>
    %c0_1 = arith.constant 0 : index
    %c0_2 = arith.constant 0 : index
    %1 = vector.load %arg2[%c0_1, %c0_2] : memref<128x10xf32, #tpu.memory_space<vmem>>, vector<128x10xf32>
    %cst = arith.constant dense<0.000000e+00> : vector<8x128xf32>
    %2 = tpu.matmul %0, %1, %cst {dimension_numbers = #tpu.dot_dimension_numbers<[1], [1], [0], [0], [0, 0, 1, 0], [], []>} : vector<8x10xf32>, vector<128x10xf32>, vector<8x128xf32> -> vector<8x128xf32>
    %c0_3 = arith.constant 0 : index
    %c0_4 = arith.constant 0 : index
    %3 = vector.load %arg3[%c0_3, %c0_4] : memref<8x128xf32, #tpu.memory_space<vmem>>, vector<8x128xf32>
    tpu.vector_store %arg3[%c0_3, %c0_4], %2 {strides = array<i32>} : memref<8x128xf32, #tpu.memory_space<vmem>>, vector<8x128xf32>,
    return
  }
  func.func @transform_0(%arg0: i32) -> (i32, i32) {
    %c0_i32 = arith.constant 0 : i32
    %c0_i32_0 = arith.constant 0 : i32
    return %arg0, %c0_i32 : i32, i32
  }
  func.func @transform_1(%arg0: i32) -> (i32, i32) {
    %c0_i32 = arith.constant 0 : i32
    %c0_i32_0 = arith.constant 0 : i32
    %c0_i32_1 = arith.constant 0 : i32
    return %c0_i32, %c0_i32_0 : i32, i32
  }
  func.func @transform_2(%arg0: i32) -> (i32, i32) {
    %c0_i32 = arith.constant 0 : i32
    %c0_i32_0 = arith.constant 0 : i32
    return %arg0, %c0_i32 : i32, i32
  }
}

</mosaic_0001>

<llo_original>
// kernel: tpu_custom_call.1
$region0: #{tpu_custom_call.1}
  #allocation0 [shape = 'u32[]', space=smem, size = 0x4, offset = 0x4, fixed_abs, tag = 'smem constant byte address 0x4 - core index']
  #allocation1 [shape = 'u32[144,128]{1,0:T(1,128)}', space=vmem, size = 0x12000, scoped, tag = 'internal scratch']
  %s0 = inlined_call_operand.vmem [shape: f32[8,10], index: 0, kind: input, shape index: {}]
  %s1 = inlined_call_operand.vmem [shape: f32[128,10], index: 1, kind: input, shape index: {}]
  %s2 = inlined_call_operand.hbm [shape: f32[8,128], index: 2, kind: output, shape index: {}]
  %s3 = sld [smem:[#allocation0]]
  $region18: #{tpu_custom_call.1} parent=0
    _
  %s5 = ssub.s32 1, %s3
  %s6 = scalar_select 0, %s5, %s3
  $region1: #{tpu_custom_call.1} parent=0
    #allocation2 [shape = 'u8[4096]{0}', space=vmem, size = 0x1000, scoped, tag = 'output window, operand 0, single buffered']
    #allocation3 [shape = 's32[1]{0}', space=sflag, size = 0x4, scoped, tag = 'scoped memory for tpu_custom_call.1']
    %7 = vsyncpa [#allocation3], 0
    // Predicated region
    $region2: #{tpu_custom_call.1} parent=1 // pred_check
      _
    $region3: #{tpu_custom_call.1} parent=1 // pred_check_branch
      %9 = sbr.rel (0) target = $region5
    $region4: #{tpu_custom_call.1} parent=1 // pred_region
      _
    $region5: #{tpu_custom_call.1} parent=1 // pred_fallthru
      _
    // Predicated region
    $region6: #{tpu_custom_call.1} parent=1 // pred_check
      _
    $region7: #{tpu_custom_call.1} parent=1 // pred_check_branch
      %11 = sbr.rel (0) target = $region9
    $region8: #{tpu_custom_call.1} parent=1 // pred_region
      _
    $region9: #{tpu_custom_call.1} parent=1 // pred_fallthru
      _
    %v12 = vld [vmem:[%s0] sm:$0xff]
    %v13 = vld [vmem:[%s1] sm:$0xff]
    %v14 = vld [vmem:[%s1 + $0x8] sm:$0xff]
    %v15 = vld [vmem:[%s1 + $0x10] sm:$0xff]
    %v16 = vld [vmem:[%s1 + $0x18] sm:$0xff]
    %v17 = vld [vmem:[%s1 + $0x20] sm:$0xff]
    %v18 = vld [vmem:[%s1 + $0x28] sm:$0xff]
    %v19 = vld [vmem:[%s1 + $0x30] sm:$0xff]
    %v20 = vld [vmem:[%s1 + $0x38] sm:$0xff]
    %v21 = vld [vmem:[%s1 + $0x40] sm:$0xff]
    %v22 = vld [vmem:[%s1 + $0x48] sm:$0xff]
    %v23 = vld [vmem:[%s1 + $0x50] sm:$0xff]
    %v24 = vld [vmem:[%s1 + $0x58] sm:$0xff]
    %v25 = vld [vmem:[%s1 + $0x60] sm:$0xff]
    %v26 = vld [vmem:[%s1 + $0x68] sm:$0xff]
    %v27 = vld [vmem:[%s1 + $0x70] sm:$0xff]
    %v28 = vld [vmem:[%s1 + $0x78] sm:$0xff]
    %vm29 = vcmask 80896
    %v31 = vsel %vm29, %v12, 0
    %v34 = vsel %vm29, %v13, 0
    %v37 = vsel %vm29, %v14, 0
    %v40 = vsel %vm29, %v15, 0
    %v43 = vsel %vm29, %v16, 0
    %v46 = vsel %vm29, %v17, 0
    %v49 = vsel %vm29, %v18, 0
    %v52 = vsel %vm29, %v19, 0
    %v55 = vsel %vm29, %v20, 0
    %v58 = vsel %vm29, %v21, 0
    %v61 = vsel %vm29, %v22, 0
    %v64 = vsel %vm29, %v23, 0
    %v67 = vsel %vm29, %v24, 0
    %v70 = vsel %vm29, %v25, 0
    %v73 = vsel %vm29, %v26, 0
    %v76 = vsel %vm29, %v27, 0
    %v79 = vsel %vm29, %v28, 0
    %81 = vmatprep.subr.mxu0 0.0
    %82 = vmatpush1.xpose.msra.mxu0 %v34
    %83 = vmatprep.subr.mxu0 0.0
    %84 = vmatpush1.xpose.msra.mxu0 %v37
    %85 = vmatprep.subr.mxu0 0.0
    %86 = vmatpush1.xpose.msra.mxu0 %v40
    %87 = vmatprep.subr.mxu0 0.0
    %88 = vmatpush1.xpose.msra.mxu0 %v43
    %89 = vmatprep.subr.mxu0 0.0
    %90 = vmatpush1.xpose.msra.mxu0 %v46
    %91 = vmatprep.subr.mxu0 0.0
    %92 = vmatpush1.xpose.msra.mxu0 %v49
    %93 = vmatprep.subr.mxu0 0.0
    %94 = vmatpush1.xpose.msra.mxu0 %v52
    %95 = vmatprep.subr.mxu0 0.0
    %96 = vmatpush1.xpose.msra.mxu0 %v55
    %97 = vmatprep.subr.mxu0 0.0
    %98 = vmatpush1.xpose.msra.mxu0 %v58
    %99 = vmatprep.subr.mxu0 0.0
    %100 = vmatpush1.xpose.msra.mxu0 %v61
    %101 = vmatprep.subr.mxu0 0.0
    %102 = vmatpush1.xpose.msra.mxu0 %v64
    %103 = vmatprep.subr.mxu0 0.0
    %104 = vmatpush1.xpose.msra.mxu0 %v67
    %105 = vmatprep.subr.mxu0 0.0
    %106 = vmatpush1.xpose.msra.mxu0 %v70
    %107 = vmatprep.subr.mxu0 0.0
    %108 = vmatpush1.xpose.msra.mxu0 %v73
    %109 = vmatprep.subr.mxu0 0.0
    %110 = vmatpush1.xpose.msra.mxu0 %v76
    %111 = vmatprep.subr.mxu0 0.0
    %112 = vmatpush1.xpose.msra.mxu0 %v79
    %113 = vmatprep.subr.mxu0 0.0
    %114 = vmatpush1.xpose.msra.mxu0 0.0
    %115 = vmatprep.subr.mxu0 0.0
    %116 = vmatpush1.xpose.msra.mxu0 0.0
    %117 = vmatprep.subr.mxu0 0.0
    %118 = vmatpush1.xpose.msra.mxu0 0.0
    %119 = vmatprep.subr.mxu0 0.0
    %120 = vmatpush1.xpose.msra.mxu0 0.0
    %121 = vmatprep.subr.mxu0 0.0
    %122 = vmatpush1.xpose.msra.mxu0 0.0
    %123 = vmatprep.subr.mxu0 0.0
    %124 = vmatpush1.xpose.msra.mxu0 0.0
    %125 = vmatprep.subr.mxu0 0.0
    %126 = vmatpush1.xpose.msra.mxu0 0.0
    %127 = vmatprep.subr.mxu0 0.0
    %128 = vmatpush1.xpose.msra.mxu0 0.0
    %129 = vmatprep.subr.mxu0 0.0
    %130 = vmatpush1.xpose.msra.mxu0 0.0
    %131 = vmatprep.subr.mxu0 0.0
    %132 = vmatpush1.xpose.msra.mxu0 0.0
    %133 = vmatprep.subr.mxu0 0.0
    %134 = vmatpush1.xpose.msra.mxu0 0.0
    %135 = vmatprep.subr.mxu0 0.0
    %136 = vmatpush1.xpose.msra.mxu0 0.0
    %137 = vmatprep.subr.mxu0 0.0
    %138 = vmatpush1.xpose.msra.mxu0 0.0
    %139 = vmatprep.subr.mxu0 0.0
    %140 = vmatpush1.xpose.msra.mxu0 0.0
    %141 = vmatprep.subr.mxu0 0.0
    %142 = vmatpush1.xpose.msra.mxu0 0.0
    %143 = vmatprep.subr.mxu0 0.0
    %144 = vmatpush1.xpose.msra.mxu0 0.0
    %145 = vmatprep.mubr.f32.mxu0 0.0
    %146 = vmatmul.mubr.f32.gmra.mrb[0].mxu0 %v31
    %v147 = vpop.f32.mrb[0].mxu0
    %v148 = vadd.f32 0.0, %v147
    %v149 = vpop.f32.mrb[0].mxu0
    %150 = vdwg.mxu0
    %151 = vst [vmem:[#allocation2] sm:$0xff] %v148
    // Predicated region
    $region10: #{tpu_custom_call.1} parent=1 // pred_check
      _
    $region11: #{tpu_custom_call.1} parent=1 // pred_check_branch
      %153 = sbr.rel (0) target = $region13
    $region12: #{tpu_custom_call.1} parent=1 // pred_region
      %s155 = ssub.s32 128, 128
      %156 = vsyncadd [#allocation3], %s155
      %s158 = sshll.u32 [#allocation2], 4
      %s159 = int_to_ptr.vmem [resolvable:$true] %s158
      %161 = dma.vmem_to_hbm [thread:$0]  %s159, 128, %s2, [#allocation3]
    $region13: #{tpu_custom_call.1} parent=1 // pred_fallthru
      _
    // Predicated region
    $region14: #{tpu_custom_call.1} parent=1 // pred_check
      _
    $region15: #{tpu_custom_call.1} parent=1 // pred_check_branch
      %163 = sbr.rel (0) target = $region17
    $region16: #{tpu_custom_call.1} parent=1 // pred_region
      %164 = dma.done [#allocation3], 128
    $region17: #{tpu_custom_call.1} parent=1 // pred_fallthru
      _
    %165 = vsyncpa [#allocation3], 1

</llo_original>
